<compile_context>
chip_gen: v7x
topology: tpu7x:2x2x1
jax: 0.10.0
libtpu: 0.0.40
codegen_flags: <defaults>
</compile_context>

<pallas_src>
import jax
import jax.numpy as jnp
from jax.experimental import pallas as pl
from jax.experimental.pallas import tpu as pltpu

LANE = 128


def _gelu_kernel(x_ref, o_ref):
    x = x_ref[...].astype(jnp.float32)
    y = x * jax.nn.sigmoid(1.702 * x)  # exp/recip -> EUP, mul -> VPU
    o_ref[...] = y.astype(o_ref.dtype)


def _sublane_multiple(dtype) -> int:
    # f32 -> 8, bf16/f16 -> 16, int8/fp8 -> 32 (sub-32-bit packs along sublanes)
    itemsize = jnp.dtype(dtype).itemsize
    return max(8, 32 // max(itemsize, 1))


def gelu(x, *, block_rows=4096):
    """Elementwise GELU (sigmoid approx) via a Pallas TPU kernel.

    Works for any shape / float dtype. Flattens to a lane-dense (rows, 128)
    slab; pads only to the minimum (sublane, 128) tile when strictly needed.
    """
    orig_shape = x.shape
    orig_dtype = x.dtype
    n = x.size
    if n == 0:
        return x

    sub = _sublane_multiple(orig_dtype)
    rows = pl.cdiv(n, LANE)
    rows_padded = pl.cdiv(rows, sub) * sub
    n_padded = rows_padded * LANE

    x_flat = jnp.ravel(x)  # metadata-only for a contiguous array
    needs_pad = n_padded != n
    if needs_pad:
        # Minimal pad to a legal (sublane, 128) tile — NOT to a block multiple.
        x_flat = jnp.pad(x_flat, (0, n_padded - n))
    x2d = x_flat.reshape(rows_padded, LANE)

    # Block sizing: ~2 MiB for f32 (block_rows=4096), clipped to the slab and
    # kept a multiple of the sublane packing.
    br = min(block_rows, rows_padded)
    br = max(sub, (br // sub) * sub)

    grid = (pl.cdiv(rows_padded, br),)
    out2d = pl.pallas_call(
        _gelu_kernel,
        out_shape=jax.ShapeDtypeStruct((rows_padded, LANE), orig_dtype),
        grid_spec=pltpu.PrefetchScalarGridSpec(
            num_scalar_prefetch=0,
            grid=grid,
            in_specs=[pl.BlockSpec((br, LANE), lambda i: (i, 0))],
            out_specs=pl.BlockSpec((br, LANE), lambda i: (i, 0)),
        ),
        compiler_params=pltpu.CompilerParams(
            dimension_semantics=("parallel",),
        ),
    )(x2d)

    if needs_pad:
        out = out2d.reshape(-1)[:n].reshape(orig_shape)
    else:
        out = out2d.reshape(orig_shape)
    return out


def _ref_gelu(x):
    xf = x.astype(jnp.float32)
    return (xf * jax.nn.sigmoid(1.702 * xf)).astype(x.dtype)


if __name__ == "__main__":
    key = jax.random.PRNGKey(0)

    # NCHW input consistent with the conv-VAE feature map in the spec.
    x = jax.random.normal(key, (2, 4, 16, 16), dtype=jnp.float32)
    y = jax.block_until_ready(gelu(x))
    assert y.shape == x.shape and y.dtype == x.dtype
    assert jnp.allclose(y, _ref_gelu(x), atol=1e-6, rtol=1e-6)

    # Ragged shape: exercises the minimal-pad path.
    k2 = jax.random.PRNGKey(0)
    x2 = jax.random.normal(k2, (3, 5, 7), dtype=jnp.float32)
    y2 = jax.block_until_ready(gelu(x2))
    assert y2.shape == x2.shape and y2.dtype == x2.dtype
    assert jnp.allclose(y2, _ref_gelu(x2), atol=1e-6, rtol=1e-6)

    # bf16 path: halves HBM traffic for this bandwidth-bound kernel.
    x3 = jax.random.normal(k2, (2, 4, 16, 16), dtype=jnp.bfloat16)
    y3 = jax.block_until_ready(gelu(x3))
    assert y3.shape == x3.shape and y3.dtype == x3.dtype
    assert jnp.allclose(
        y3.astype(jnp.float32), _ref_gelu(x3).astype(jnp.float32),
        atol=1e-2, rtol=1e-2,
    )

    print("KERNEL_OK")
</pallas_src>

<mosaic_0001>
module attributes {stable_mosaic.version = 11 : i64} {
  func.func @_gelu_kernel(%arg0: i32, %arg1: memref<16x128xf32, #tpu.memory_space<vmem>>, %arg2: memref<16x128xf32, #tpu.memory_space<vmem>>) attributes {dimension_semantics = [#tpu.dimension_semantics<parallel>], iteration_bounds = array<i64: 1>, scalar_prefetch = 0 : i64, scratch_operands = 0 : i64, tpu.core_type = #tpu.core_type<tc>, window_params = [{transform_indices = @transform_0, window_bounds = array<i64: 16, 128>}, {transform_indices = @transform_1, window_bounds = array<i64: 16, 128>}]} {
    %c0 = arith.constant 0 : index
    %c0_0 = arith.constant 0 : index
    %0 = vector.load %arg1[%c0, %c0_0] : memref<16x128xf32, #tpu.memory_space<vmem>>, vector<16x128xf32>
    %cst = arith.constant 1.702000e+00 : f32
    %1 = vector.broadcast %cst : f32 to vector<16x128xf32>
    %2 = arith.mulf %1, %0 : vector<16x128xf32>
    %3 = arith.negf %2 : vector<16x128xf32>
    %4 = math.exp %3 : vector<16x128xf32>
    %cst_1 = arith.constant 1.000000e+00 : f32
    %5 = vector.broadcast %cst_1 : f32 to vector<16x128xf32>
    %6 = arith.addf %5, %4 : vector<16x128xf32>
    %7 = arith.divf %5, %6 : vector<16x128xf32>
    %8 = arith.mulf %0, %7 : vector<16x128xf32>
    %c0_2 = arith.constant 0 : index
    %c0_3 = arith.constant 0 : index
    %9 = vector.load %arg2[%c0_2, %c0_3] : memref<16x128xf32, #tpu.memory_space<vmem>>, vector<16x128xf32>
    tpu.vector_store %arg2[%c0_2, %c0_3], %8 {strides = array<i32>} : memref<16x128xf32, #tpu.memory_space<vmem>>, vector<16x128xf32>,
    return
  }
  func.func @transform_0(%arg0: i32) -> (i32, i32) {
    %c0_i32 = arith.constant 0 : i32
    %c0_i32_0 = arith.constant 0 : i32
    return %arg0, %c0_i32 : i32, i32
  }
  func.func @transform_1(%arg0: i32) -> (i32, i32) {
    %c0_i32 = arith.constant 0 : i32
    %c0_i32_0 = arith.constant 0 : i32
    return %arg0, %c0_i32 : i32, i32
  }
}

</mosaic_0001>

<llo_original>
// kernel: tpu_custom_call.1
$region0: #{tpu_custom_call.1}
  #allocation0 [shape = 'u32[]', space=smem, size = 0x4, offset = 0x4, fixed_abs, tag = 'smem constant byte address 0x4 - core index']
  #allocation1 [shape = 'u32[144,128]{1,0:T(1,128)}', space=vmem, size = 0x12000, scoped, tag = 'internal scratch']
  %s0 = inlined_call_operand.hbm [shape: f32[16,128], index: 0, kind: input, shape index: {}]
  %s1 = inlined_call_operand.hbm [shape: f32[16,128], index: 1, kind: output, shape index: {}]
  %s2 = sld [smem:[#allocation0]]
  $region18: #{tpu_custom_call.1} parent=0
    _
  %s4 = ssub.s32 1, %s2
  %s5 = scalar_select 0, %s4, %s2
  $region1: #{tpu_custom_call.1} parent=0
    #allocation2 [shape = 'u8[8192]{0}', space=vmem, size = 0x2000, scoped, tag = 'input window, operand 0, single buffered']
    #allocation3 [shape = 's32[1]{0}', space=sflag, size = 0x4, scoped, tag = 'scoped memory for tpu_custom_call.1']
    #allocation4 [shape = 's32[1]{0}', space=sflag, size = 0x4, scoped, tag = 'scoped memory for tpu_custom_call.1']
    #allocation5 [shape = 'u8[8192]{0}', space=vmem, size = 0x2000, scoped, tag = 'output window, operand 0, single buffered']
    %6 = vsyncpa [#allocation3], 0
    %7 = vsyncpa [#allocation4], 0
    // Predicated region
    $region2: #{tpu_custom_call.1} parent=1 // pred_check
      _
    $region3: #{tpu_custom_call.1} parent=1 // pred_check_branch
      %9 = sbr.rel (0) target = $region5
    $region4: #{tpu_custom_call.1} parent=1 // pred_region
      %s11 = ssub.s32 256, 256
      %12 = vsyncadd [#allocation3], %s11
      %s13 = sshll.u32 [#allocation2], 4
      %s14 = int_to_ptr.vmem [resolvable:$true] %s13
      %19 = dma.hbm_to_vmem [thread:$0]  %s0, 256, %s14, [#allocation3], 128, 128, 8
    $region5: #{tpu_custom_call.1} parent=1 // pred_fallthru
      _
    // Predicated region
    $region6: #{tpu_custom_call.1} parent=1 // pred_check
      _
    $region7: #{tpu_custom_call.1} parent=1 // pred_check_branch
      %21 = sbr.rel (0) target = $region9
    $region8: #{tpu_custom_call.1} parent=1 // pred_region
      %22 = dma.done [#allocation3], 256
    $region9: #{tpu_custom_call.1} parent=1 // pred_fallthru
      _
    %v23 = vld [vmem:[#allocation2] sm:$0xff]
    %v24 = vld [vmem:[#allocation2 + $0x8] sm:$0xff]
    %v25 = vmul.f32 %v23, 1.702
    %v26 = vmul.f32 %v24, 1.702
    %v27 = vxor.u32 %v25, 2147483648
    %v28 = vxor.u32 %v26, 2147483648
    %v29 = vmul.f32 %v27, 1.442695
    %v30 = vpow.pop %v29
    %v31 = vmul.f32 %v28, 1.442695
    %v32 = vpow.pop %v31
    %v33 = vadd.f32 %v30, 1.0
    %v34 = vadd.f32 %v32, 1.0
    %v35 = vrcp.pop %v33
    %v36 = vmul.f32 1.0, %v35
    %v37 = vrcp.pop %v34
    %v38 = vmul.f32 1.0, %v37
    %v39 = vmul.f32 %v23, %v36
    %v40 = vmul.f32 %v24, %v38
    %41 = vst [vmem:[#allocation5] sm:$0xff] %v39
    %42 = vst [vmem:[#allocation5 + $0x8] sm:$0xff] %v40
    // Predicated region
    $region10: #{tpu_custom_call.1} parent=1 // pred_check
      _
    $region11: #{tpu_custom_call.1} parent=1 // pred_check_branch
      %44 = sbr.rel (0) target = $region13
    $region12: #{tpu_custom_call.1} parent=1 // pred_region
      %s46 = ssub.s32 256, 256
      %47 = vsyncadd [#allocation4], %s46
      %s48 = sshll.u32 [#allocation5], 4
      %s49 = int_to_ptr.vmem [resolvable:$true] %s48
      %54 = dma.vmem_to_hbm [thread:$0]  %s49, 256, %s1, [#allocation4], 128, 128, 8
    $region13: #{tpu_custom_call.1} parent=1 // pred_fallthru
      _
    // Predicated region
    $region14: #{tpu_custom_call.1} parent=1 // pred_check
      _
    $region15: #{tpu_custom_call.1} parent=1 // pred_check_branch
      %56 = sbr.rel (0) target = $region17
    $region16: #{tpu_custom_call.1} parent=1 // pred_region
      %57 = dma.done [#allocation4], 256
    $region17: #{tpu_custom_call.1} parent=1 // pred_fallthru
      _
    %58 = vsyncpa [#allocation3], 1
    %59 = vsyncpa [#allocation4], 1

</llo_original>
